<compile_context>
chip_gen: v7x
topology: tpu7x:2x2x1
jax: 0.10.0
libtpu: 0.0.40
codegen_flags: <defaults>
</compile_context>

<pallas_src>
import numpy as np
import jax
import jax.numpy as jnp
from jax.experimental import pallas as pl
from jax.experimental.pallas import tpu as pltpu


# ----------------------------------------------------------------------------
# Pallas kernel 1: per-frequency complex matmul  Y_f = Q_f @ X_f
# ----------------------------------------------------------------------------
def _make_spectral_kernel(cout, cin, batches):
    def kernel(q_ref, x_ref, y_ref):
        # q_ref: (2, cin*cout, TF)     row j*cout + i holds Q[i, j]   (re/im planes)
        # x_ref: (2, batches*cin, TF)  row b*cin  + j holds X[b, j]
        # y_ref: (2, batches*cout, TF) row b*cout + i gets  Y[b, i]
        for b in range(batches):
            acc_r = None
            acc_i = None
            for j in range(cin):                      # accumulate over Cin (unrolled)
                q0 = j * cout
                q_r = q_ref[0, q0:q0 + cout, :]       # (cout, TF)
                q_i = q_ref[1, q0:q0 + cout, :]
                x0 = b * cin + j
                x_r = x_ref[0, x0:x0 + 1, :]          # (1, TF) -> sublane broadcast
                x_i = x_ref[1, x0:x0 + 1, :]
                t_r = q_r * x_r - q_i * x_i
                t_i = q_r * x_i + q_i * x_r
                acc_r = t_r if acc_r is None else acc_r + t_r
                acc_i = t_i if acc_i is None else acc_i + t_i
            y0 = b * cout
            y_ref[0, y0:y0 + cout, :] = acc_r
            y_ref[1, y0:y0 + cout, :] = acc_i
    return kernel


def spectral_matmul_pallas(q_cf, x_bf, cout, cin, batches):
    """q_cf: (2, cin*cout, F) f32, x_bf: (2, batches*cin, F) f32
       -> (2, batches*cout, F) f32 with y[p, b*cout+i, f] = (Q_f @ X_f)[i, b]."""
    F = q_cf.shape[-1]
    # lane-dense frequency tiles: multiple of 128, target 512 lanes
    TF = 512 if F > 512 else pl.cdiv(F, 128) * 128
    F_pad = pl.cdiv(F, TF) * TF
    if F_pad != F:
        q_cf = jnp.pad(q_cf, ((0, 0), (0, 0), (0, F_pad - F)))
        x_bf = jnp.pad(x_bf, ((0, 0), (0, 0), (0, F_pad - F)))

    y = pl.pallas_call(
        _make_spectral_kernel(cout, cin, batches),
        out_shape=jax.ShapeDtypeStruct((2, batches * cout, F_pad), jnp.float32),
        grid=(F_pad // TF,),
        in_specs=[pl.BlockSpec((2, cin * cout, TF), lambda t: (0, 0, t)),
                  pl.BlockSpec((2, batches * cin, TF), lambda t: (0, 0, t))],
        out_specs=pl.BlockSpec((2, batches * cout, TF), lambda t: (0, 0, t)),
        compiler_params=pltpu.CompilerParams(
            dimension_semantics=("parallel",),       # megacore-shard F tiles on v7x
            vmem_limit_bytes=32 * 1024 * 1024),
    )(q_cf, x_bf)

    if F_pad != F:
        y = y[:, :, :F]
    return y


# ----------------------------------------------------------------------------
# Pallas kernel 2: lane-dense bias + ReLU
# ----------------------------------------------------------------------------
def _bias_relu_kernel(y_ref, b_ref, o_ref):
    o_ref[...] = jnp.maximum(y_ref[...] + b_ref[...], 0.0)


def bias_relu_pallas(y, bias):
    """y: (B, C, H, W) f32, bias: (C,) f32 -> relu(y + bias[c])."""
    B, C, H, W = y.shape
    HW = H * W
    y2 = y.reshape(B * C, HW)
    brow = jnp.tile(bias.astype(jnp.float32), B).reshape(B * C, 1)   # row b*C+c -> bias[c]
    TL = HW if HW <= 2048 else 2048                                  # lane tile (mult of 128 or full)
    out = pl.pallas_call(
        _bias_relu_kernel,
        out_shape=jax.ShapeDtypeStruct((B * C, HW), jnp.float32),
        grid=(pl.cdiv(HW, TL),),
        in_specs=[pl.BlockSpec((B * C, TL), lambda t: (0, t)),
                  pl.BlockSpec((B * C, 1), lambda t: (0, 0))],
        out_specs=pl.BlockSpec((B * C, TL), lambda t: (0, t)),
        compiler_params=pltpu.CompilerParams(dimension_semantics=("parallel",)),
    )(y2, brow)
    return out.reshape(B, C, H, W)


# ----------------------------------------------------------------------------
# Plain-JAX glue: shift matrix, complex helpers, Cayley transform
# ----------------------------------------------------------------------------
def fft_shift_matrix(n, s):
    idx = jnp.arange(n)
    shift = (idx[None, :] + idx[:, None]).astype(jnp.float32)
    theta = 2.0 * np.pi * s * shift / n
    return jax.lax.complex(jnp.cos(theta), jnp.sin(theta))            # exp(1j*2*pi*s*shift/n)


def cplx_matmul(a, b):
    ar, ai = jnp.real(a), jnp.imag(a)
    br, bi = jnp.real(b), jnp.imag(b)
    return jax.lax.complex(ar @ br - ai @ bi, ar @ bi + ai @ br)


def cplx_inv(c):
    # complex batched inverse via the real 2x2 block-matrix trick
    ar, ai = jnp.real(c), jnp.imag(c)
    m = c.shape[-1]
    M = jnp.concatenate([jnp.concatenate([ar, -ai], axis=-1),
                         jnp.concatenate([ai, ar], axis=-1)], axis=-2)
    Minv = jnp.linalg.inv(M)
    return jax.lax.complex(Minv[..., :m, :m], Minv[..., m:, :m])


def cayley(W):
    # W: (F, cout, cin) complex
    _, cout, cin = W.shape
    if cin > cout:
        return jnp.swapaxes(cayley(jnp.swapaxes(W, 1, 2)), 1, 2)
    U, V = W[:, :cin], W[:, cin:]
    I = jnp.eye(cin, dtype=W.dtype)[None, :, :]
    A = U - jnp.conj(jnp.swapaxes(U, 1, 2))
    if V.shape[1] > 0:
        A = A + cplx_matmul(jnp.conj(jnp.swapaxes(V, 1, 2)), V)
    iIpA = cplx_inv(I + A)
    top = cplx_matmul(iIpA, I - A)
    if V.shape[1] > 0:
        return jnp.concatenate([top, -2.0 * cplx_matmul(V, iIpA)], axis=1)
    return top


# ----------------------------------------------------------------------------
# OrthogonConv forward
# ----------------------------------------------------------------------------
def orthogon_conv_forward(x, weight, bias, scale=1.0, alpha=None, use_pallas=True):
    """x: (B, Cin, n, n) f32; weight: (Cout, Cin, k, k) f32; bias: (Cout,) f32.
    alpha=None reproduces the PyTorch first-forward init (alpha <- ||wfft||)."""
    x = scale * x
    cout, cin, k, _ = weight.shape
    B, _, n, _ = x.shape
    nh = n // 2 + 1
    F = n * nh

    s = (k - 1) // 2
    shift = fft_shift_matrix(n, -s)[:, :nh].reshape(1, 1, F)          # (1, 1, F)

    # ---- activations: frequency-last end-to-end, reshapes only ----
    xfft = jnp.fft.rfft2(x).reshape(B, cin, F)                        # (B, Cin, F)
    x_bf = jnp.stack([jnp.real(xfft), jnp.imag(xfft)]
                     ).astype(jnp.float32).reshape(2, B * cin, F)     # (2, B*Cin, F)

    # ---- weights / Cayley (tiny tensors; transposes here are negligible) ----
    wfft = jnp.conj(jnp.fft.rfft2(weight, s=(n, n)).reshape(cout, cin, F)) * shift  # (Cout, Cin, F)
    wnorm = jnp.linalg.norm(wfft)
    a = wnorm if alpha is None else alpha            # alpha==None: first-forward init (identity scaling)
    Qfft = cayley((a * wfft / wnorm).transpose(2, 0, 1))              # (F, Cout, Cin)

    q_t = jnp.transpose(Qfft, (2, 1, 0))                              # (Cin, Cout, F)
    q_cf = jnp.stack([jnp.real(q_t), jnp.imag(q_t)]
                     ).astype(jnp.float32).reshape(2, cin * cout, F)  # (2, Cin*Cout, F)

    # ---- per-frequency complex matmul ----
    if use_pallas:
        y_bf = spectral_matmul_pallas(q_cf, x_bf, cout, cin, B)       # (2, B*Cout, F)
        yr = y_bf[0].reshape(B, cout, n, nh)
        yi = y_bf[1].reshape(B, cout, n, nh)
    else:
        Qc = jax.lax.complex(q_cf[0], q_cf[1]).reshape(cin, cout, F)
        Xc = jax.lax.complex(x_bf[0], x_bf[1]).reshape(B, cin, F)
        Yc = jnp.einsum('jif,bjf->bif', Qc, Xc)                       # (B, Cout, F)
        yr = jnp.real(Yc).reshape(B, cout, n, nh)
        yi = jnp.imag(Yc).reshape(B, cout, n, nh)

    yfft = jax.lax.complex(yr, yi)                                    # (B, Cout, n, nh)
    y = jnp.fft.irfft2(yfft, s=(n, n)).astype(jnp.float32)            # (B, Cout, n, n)

    if use_pallas:
        y = bias_relu_pallas(y, bias.astype(jnp.float32))
    else:
        y = jnp.maximum(y + bias[None, :, None, None].astype(jnp.float32), 0.0)
    return y


# ----------------------------------------------------------------------------
if __name__ == "__main__":
    key = jax.random.PRNGKey(0)
    kx, kw, kb = jax.random.split(key, 3)

    # small shapes consistent with the module: stride=1 OrthogonConv(4, 4, 3)
    B, Cin, Cout, n, k = 2, 4, 4, 16, 3
    x = jax.random.normal(kx, (B, Cin, n, n), dtype=jnp.float32)
    weight = 0.1 * jax.random.normal(kw, (Cout, Cin, k, k), dtype=jnp.float32)
    bias = 0.1 * jax.random.normal(kb, (Cout,), dtype=jnp.float32)

    y = orthogon_conv_forward(x, weight, bias, scale=1.0, use_pallas=True)
    y = jax.block_until_ready(y)

    # pure-JAX reference of the same math (no Pallas) for a sanity check
    y_ref = orthogon_conv_forward(x, weight, bias, scale=1.0, use_pallas=False)
    y_ref = jax.block_until_ready(y_ref)

    assert y.shape == (B, Cout, n, n)
    max_err = float(jnp.max(jnp.abs(y - y_ref)))
    assert max_err < 1e-3, f"mismatch vs reference: {max_err}"
    print("KERNEL_OK")
</pallas_src>

<mosaic_0001>
module attributes {stable_mosaic.version = 11 : i64} {
  func.func @kernel(%arg0: i32, %arg1: memref<2x16x256xf32, #tpu.memory_space<vmem>>, %arg2: memref<2x8x256xf32, #tpu.memory_space<vmem>>, %arg3: memref<2x8x256xf32, #tpu.memory_space<vmem>>) attributes {dimension_semantics = [#tpu.dimension_semantics<parallel>], iteration_bounds = array<i64: 1>, scalar_prefetch = 0 : i64, scratch_operands = 0 : i64, tpu.core_type = #tpu.core_type<tc>, window_params = [{transform_indices = @transform_0, window_bounds = array<i64: 2, 16, 256>}, {transform_indices = @transform_1, window_bounds = array<i64: 2, 8, 256>}, {transform_indices = @transform_2, window_bounds = array<i64: 2, 8, 256>}]} {
    %c0 = arith.constant 0 : index
    %c0_0 = arith.constant 0 : index
    %c0_1 = arith.constant 0 : index
    %0 = vector.load %arg1[%c0, %c0_0, %c0_1] : memref<2x16x256xf32, #tpu.memory_space<vmem>>, vector<1x4x256xf32>
    %1 = vector.shape_cast %0 : vector<1x4x256xf32> to vector<4x256xf32>
    %c1 = arith.constant 1 : index
    %c0_2 = arith.constant 0 : index
    %c0_3 = arith.constant 0 : index
    %2 = vector.load %arg1[%c1, %c0_2, %c0_3] : memref<2x16x256xf32, #tpu.memory_space<vmem>>, vector<1x4x256xf32>
    %3 = vector.shape_cast %2 : vector<1x4x256xf32> to vector<4x256xf32>
    %c0_4 = arith.constant 0 : index
    %c0_5 = arith.constant 0 : index
    %c0_6 = arith.constant 0 : index
    %4 = vector.load %arg2[%c0_4, %c0_5, %c0_6] : memref<2x8x256xf32, #tpu.memory_space<vmem>>, vector<1x1x256xf32>
    %5 = vector.shape_cast %4 : vector<1x1x256xf32> to vector<1x256xf32>
    %c1_7 = arith.constant 1 : index
    %c0_8 = arith.constant 0 : index
    %c0_9 = arith.constant 0 : index
    %6 = vector.load %arg2[%c1_7, %c0_8, %c0_9] : memref<2x8x256xf32, #tpu.memory_space<vmem>>, vector<1x1x256xf32>
    %7 = vector.shape_cast %6 : vector<1x1x256xf32> to vector<1x256xf32>
    %8 = vector.broadcast %5 : vector<1x256xf32> to vector<4x256xf32>
    %9 = arith.mulf %1, %8 : vector<4x256xf32>
    %10 = vector.broadcast %7 : vector<1x256xf32> to vector<4x256xf32>
    %11 = arith.mulf %3, %10 : vector<4x256xf32>
    %12 = arith.subf %9, %11 : vector<4x256xf32>
    %13 = vector.broadcast %7 : vector<1x256xf32> to vector<4x256xf32>
    %14 = arith.mulf %1, %13 : vector<4x256xf32>
    %15 = vector.broadcast %5 : vector<1x256xf32> to vector<4x256xf32>
    %16 = arith.mulf %3, %15 : vector<4x256xf32>
    %17 = arith.addf %14, %16 : vector<4x256xf32>
    %c0_10 = arith.constant 0 : index
    %c4 = arith.constant 4 : index
    %c0_11 = arith.constant 0 : index
    %18 = vector.load %arg1[%c0_10, %c4, %c0_11] : memref<2x16x256xf32, #tpu.memory_space<vmem>>, vector<1x4x256xf32>
    %19 = vector.shape_cast %18 : vector<1x4x256xf32> to vector<4x256xf32>
    %c1_12 = arith.constant 1 : index
    %c4_13 = arith.constant 4 : index
    %c0_14 = arith.constant 0 : index
    %20 = vector.load %arg1[%c1_12, %c4_13, %c0_14] : memref<2x16x256xf32, #tpu.memory_space<vmem>>, vector<1x4x256xf32>
    %21 = vector.shape_cast %20 : vector<1x4x256xf32> to vector<4x256xf32>
    %c0_15 = arith.constant 0 : index
    %c1_16 = arith.constant 1 : index
    %c0_17 = arith.constant 0 : index
    %22 = vector.load %arg2[%c0_15, %c1_16, %c0_17] : memref<2x8x256xf32, #tpu.memory_space<vmem>>, vector<1x1x256xf32>
    %23 = vector.shape_cast %22 : vector<1x1x256xf32> to vector<1x256xf32>
    %c1_18 = arith.constant 1 : index
    %c1_19 = arith.constant 1 : index
    %c0_20 = arith.constant 0 : index
    %24 = vector.load %arg2[%c1_18, %c1_19, %c0_20] : memref<2x8x256xf32, #tpu.memory_space<vmem>>, vector<1x1x256xf32>
    %25 = vector.shape_cast %24 : vector<1x1x256xf32> to vector<1x256xf32>
    %26 = vector.broadcast %23 : vector<1x256xf32> to vector<4x256xf32>
    %27 = arith.mulf %19, %26 : vector<4x256xf32>
    %28 = vector.broadcast %25 : vector<1x256xf32> to vector<4x256xf32>
    %29 = arith.mulf %21, %28 : vector<4x256xf32>
    %30 = arith.subf %27, %29 : vector<4x256xf32>
    %31 = vector.broadcast %25 : vector<1x256xf32> to vector<4x256xf32>
    %32 = arith.mulf %19, %31 : vector<4x256xf32>
    %33 = vector.broadcast %23 : vector<1x256xf32> to vector<4x256xf32>
    %34 = arith.mulf %21, %33 : vector<4x256xf32>
    %35 = arith.addf %32, %34 : vector<4x256xf32>
    %36 = arith.addf %12, %30 : vector<4x256xf32>
    %37 = arith.addf %17, %35 : vector<4x256xf32>
    %c0_21 = arith.constant 0 : index
    %c8 = arith.constant 8 : index
    %c0_22 = arith.constant 0 : index
    %38 = vector.load %arg1[%c0_21, %c8, %c0_22] : memref<2x16x256xf32, #tpu.memory_space<vmem>>, vector<1x4x256xf32>
    %39 = vector.shape_cast %38 : vector<1x4x256xf32> to vector<4x256xf32>
    %c1_23 = arith.constant 1 : index
    %c8_24 = arith.constant 8 : index
    %c0_25 = arith.constant 0 : index
    %40 = vector.load %arg1[%c1_23, %c8_24, %c0_25] : memref<2x16x256xf32, #tpu.memory_space<vmem>>, vector<1x4x256xf32>
    %41 = vector.shape_cast %40 : vector<1x4x256xf32> to vector<4x256xf32>
    %c0_26 = arith.constant 0 : index
    %c2 = arith.constant 2 : index
    %c0_27 = arith.constant 0 : index
    %42 = vector.load %arg2[%c0_26, %c2, %c0_27] : memref<2x8x256xf32, #tpu.memory_space<vmem>>, vector<1x1x256xf32>
    %43 = vector.shape_cast %42 : vector<1x1x256xf32> to vector<1x256xf32>
    %c1_28 = arith.constant 1 : index
    %c2_29 = arith.constant 2 : index
    %c0_30 = arith.constant 0 : index
    %44 = vector.load %arg2[%c1_28, %c2_29, %c0_30] : memref<2x8x256xf32, #tpu.memory_space<vmem>>, vector<1x1x256xf32>
    %45 = vector.shape_cast %44 : vector<1x1x256xf32> to vector<1x256xf32>
    %46 = vector.broadcast %43 : vector<1x256xf32> to vector<4x256xf32>
    %47 = arith.mulf %39, %46 : vector<4x256xf32>
    %48 = vector.broadcast %45 : vector<1x256xf32> to vector<4x256xf32>
    %49 = arith.mulf %41, %48 : vector<4x256xf32>
    %50 = arith.subf %47, %49 : vector<4x256xf32>
    %51 = vector.broadcast %45 : vector<1x256xf32> to vector<4x256xf32>
    %52 = arith.mulf %39, %51 : vector<4x256xf32>
    %53 = vector.broadcast %43 : vector<1x256xf32> to vector<4x256xf32>
    %54 = arith.mulf %41, %53 : vector<4x256xf32>
    %55 = arith.addf %52, %54 : vector<4x256xf32>
    %56 = arith.addf %36, %50 : vector<4x256xf32>
    %57 = arith.addf %37, %55 : vector<4x256xf32>
    %c0_31 = arith.constant 0 : index
    %c12 = arith.constant 12 : index
    %c0_32 = arith.constant 0 : index
    %58 = vector.load %arg1[%c0_31, %c12, %c0_32] : memref<2x16x256xf32, #tpu.memory_space<vmem>>, vector<1x4x256xf32>
    %59 = vector.shape_cast %58 : vector<1x4x256xf32> to vector<4x256xf32>
    %c1_33 = arith.constant 1 : index
    %c12_34 = arith.constant 12 : index
    %c0_35 = arith.constant 0 : index
    %60 = vector.load %arg1[%c1_33, %c12_34, %c0_35] : memref<2x16x256xf32, #tpu.memory_space<vmem>>, vector<1x4x256xf32>
    %61 = vector.shape_cast %60 : vector<1x4x256xf32> to vector<4x256xf32>
    %c0_36 = arith.constant 0 : index
    %c3 = arith.constant 3 : index
    %c0_37 = arith.constant 0 : index
    %62 = vector.load %arg2[%c0_36, %c3, %c0_37] : memref<2x8x256xf32, #tpu.memory_space<vmem>>, vector<1x1x256xf32>
    %63 = vector.shape_cast %62 : vector<1x1x256xf32> to vector<1x256xf32>
    %c1_38 = arith.constant 1 : index
    %c3_39 = arith.constant 3 : index
    %c0_40 = arith.constant 0 : index
    %64 = vector.load %arg2[%c1_38, %c3_39, %c0_40] : memref<2x8x256xf32, #tpu.memory_space<vmem>>, vector<1x1x256xf32>
    %65 = vector.shape_cast %64 : vector<1x1x256xf32> to vector<1x256xf32>
    %66 = vector.broadcast %63 : vector<1x256xf32> to vector<4x256xf32>
    %67 = arith.mulf %59, %66 : vector<4x256xf32>
    %68 = vector.broadcast %65 : vector<1x256xf32> to vector<4x256xf32>
    %69 = arith.mulf %61, %68 : vector<4x256xf32>
    %70 = arith.subf %67, %69 : vector<4x256xf32>
    %71 = vector.broadcast %65 : vector<1x256xf32> to vector<4x256xf32>
    %72 = arith.mulf %59, %71 : vector<4x256xf32>
    %73 = vector.broadcast %63 : vector<1x256xf32> to vector<4x256xf32>
    %74 = arith.mulf %61, %73 : vector<4x256xf32>
    %75 = arith.addf %72, %74 : vector<4x256xf32>
    %76 = arith.addf %56, %70 : vector<4x256xf32>
    %77 = arith.addf %57, %75 : vector<4x256xf32>
    %c0_41 = arith.constant 0 : index
    %c0_42 = arith.constant 0 : index
    %c0_43 = arith.constant 0 : index
    %78 = vector.load %arg3[%c0_41, %c0_42, %c0_43] : memref<2x8x256xf32, #tpu.memory_space<vmem>>, vector<1x4x256xf32>
    %79 = vector.shape_cast %78 : vector<1x4x256xf32> to vector<4x256xf32>
    %80 = vector.shape_cast %76 : vector<4x256xf32> to vector<1x4x256xf32>
    tpu.vector_store %arg3[%c0_41, %c0_42, %c0_43], %80 {strides = array<i32>} : memref<2x8x256xf32, #tpu.memory_space<vmem>>, vector<1x4x256xf32>,
    %c1_44 = arith.constant 1 : index
    %c0_45 = arith.constant 0 : index
    %c0_46 = arith.constant 0 : index
    %81 = vector.load %arg3[%c1_44, %c0_45, %c0_46] : memref<2x8x256xf32, #tpu.memory_space<vmem>>, vector<1x4x256xf32>
    %82 = vector.shape_cast %81 : vector<1x4x256xf32> to vector<4x256xf32>
    %83 = vector.shape_cast %77 : vector<4x256xf32> to vector<1x4x256xf32>
    tpu.vector_store %arg3[%c1_44, %c0_45, %c0_46], %83 {strides = array<i32>} : memref<2x8x256xf32, #tpu.memory_space<vmem>>, vector<1x4x256xf32>,
    %c0_47 = arith.constant 0 : index
    %c0_48 = arith.constant 0 : index
    %c0_49 = arith.constant 0 : index
    %84 = vector.load %arg1[%c0_47, %c0_48, %c0_49] : memref<2x16x256xf32, #tpu.memory_space<vmem>>, vector<1x4x256xf32>
    %85 = vector.shape_cast %84 : vector<1x4x256xf32> to vector<4x256xf32>
    %c1_50 = arith.constant 1 : index
    %c0_51 = arith.constant 0 : index
    %c0_52 = arith.constant 0 : index
    %86 = vector.load %arg1[%c1_50, %c0_51, %c0_52] : memref<2x16x256xf32, #tpu.memory_space<vmem>>, vector<1x4x256xf32>
    %87 = vector.shape_cast %86 : vector<1x4x256xf32> to vector<4x256xf32>
    %c0_53 = arith.constant 0 : index
    %c4_54 = arith.constant 4 : index
    %c0_55 = arith.constant 0 : index
    %88 = vector.load %arg2[%c0_53, %c4_54, %c0_55] : memref<2x8x256xf32, #tpu.memory_space<vmem>>, vector<1x1x256xf32>
    %89 = vector.shape_cast %88 : vector<1x1x256xf32> to vector<1x256xf32>
    %c1_56 = arith.constant 1 : index
    %c4_57 = arith.constant 4 : index
    %c0_58 = arith.constant 0 : index
    %90 = vector.load %arg2[%c1_56, %c4_57, %c0_58] : memref<2x8x256xf32, #tpu.memory_space<vmem>>, vector<1x1x256xf32>
    %91 = vector.shape_cast %90 : vector<1x1x256xf32> to vector<1x256xf32>
    %92 = vector.broadcast %89 : vector<1x256xf32> to vector<4x256xf32>
    %93 = arith.mulf %85, %92 : vector<4x256xf32>
    %94 = vector.broadcast %91 : vector<1x256xf32> to vector<4x256xf32>
    %95 = arith.mulf %87, %94 : vector<4x256xf32>
    %96 = arith.subf %93, %95 : vector<4x256xf32>
    %97 = vector.broadcast %91 : vector<1x256xf32> to vector<4x256xf32>
    %98 = arith.mulf %85, %97 : vector<4x256xf32>
    %99 = vector.broadcast %89 : vector<1x256xf32> to vector<4x256xf32>
    %100 = arith.mulf %87, %99 : vector<4x256xf32>
    %101 = arith.addf %98, %100 : vector<4x256xf32>
    %c0_59 = arith.constant 0 : index
    %c4_60 = arith.constant 4 : index
    %c0_61 = arith.constant 0 : index
    %102 = vector.load %arg1[%c0_59, %c4_60, %c0_61] : memref<2x16x256xf32, #tpu.memory_space<vmem>>, vector<1x4x256xf32>
    %103 = vector.shape_cast %102 : vector<1x4x256xf32> to vector<4x256xf32>
    %c1_62 = arith.constant 1 : index
    %c4_63 = arith.constant 4 : index
    %c0_64 = arith.constant 0 : index
    %104 = vector.load %arg1[%c1_62, %c4_63, %c0_64] : memref<2x16x256xf32, #tpu.memory_space<vmem>>, vector<1x4x256xf32>
    %105 = vector.shape_cast %104 : vector<1x4x256xf32> to vector<4x256xf32>
    %c0_65 = arith.constant 0 : index
    %c5 = arith.constant 5 : index
    %c0_66 = arith.constant 0 : index
    %106 = vector.load %arg2[%c0_65, %c5, %c0_66] : memref<2x8x256xf32, #tpu.memory_space<vmem>>, vector<1x1x256xf32>
    %107 = vector.shape_cast %106 : vector<1x1x256xf32> to vector<1x256xf32>
    %c1_67 = arith.constant 1 : index
    %c5_68 = arith.constant 5 : index
    %c0_69 = arith.constant 0 : index
    %108 = vector.load %arg2[%c1_67, %c5_68, %c0_69] : memref<2x8x256xf32, #tpu.memory_space<vmem>>, vector<1x1x256xf32>
    %109 = vector.shape_cast %108 : vector<1x1x256xf32> to vector<1x256xf32>
    %110 = vector.broadcast %107 : vector<1x256xf32> to vector<4x256xf32>
    %111 = arith.mulf %103, %110 : vector<4x256xf32>
    %112 = vector.broadcast %109 : vector<1x256xf32> to vector<4x256xf32>
    %113 = arith.mulf %105, %112 : vector<4x256xf32>
    %114 = arith.subf %111, %113 : vector<4x256xf32>
    %115 = vector.broadcast %109 : vector<1x256xf32> to vector<4x256xf32>
    %116 = arith.mulf %103, %115 : vector<4x256xf32>
    %117 = vector.broadcast %107 : vector<1x256xf32> to vector<4x256xf32>
    %118 = arith.mulf %105, %117 : vector<4x256xf32>
    %119 = arith.addf %116, %118 : vector<4x256xf32>
    %120 = arith.addf %96, %114 : vector<4x256xf32>
    %121 = arith.addf %101, %119 : vector<4x256xf32>
    %c0_70 = arith.constant 0 : index
    %c8_71 = arith.constant 8 : index
    %c0_72 = arith.constant 0 : index
    %122 = vector.load %arg1[%c0_70, %c8_71, %c0_72] : memref<2x16x256xf32, #tpu.memory_space<vmem>>, vector<1x4x256xf32>
    %123 = vector.shape_cast %122 : vector<1x4x256xf32> to vector<4x256xf32>
    %c1_73 = arith.constant 1 : index
    %c8_74 = arith.constant 8 : index
    %c0_75 = arith.constant 0 : index
    %124 = vector.load %arg1[%c1_73, %c8_74, %c0_75] : memref<2x16x256xf32, #tpu.memory_space<vmem>>, vector<1x4x256xf32>
    %125 = vector.shape_cast %124 : vector<1x4x256xf32> to vector<4x256xf32>
    %c0_76 = arith.constant 0 : index
    %c6 = arith.constant 6 : index
    %c0_77 = arith.constant 0 : index
    %126 = vector.load %arg2[%c0_76, %c6, %c0_77] : memref<2x8x256xf32, #tpu.memory_space<vmem>>, vector<1x1x256xf32>
    %127 = vector.shape_cast %126 : vector<1x1x256xf32> to vector<1x256xf32>
    %c1_78 = arith.constant 1 : index
    %c6_79 = arith.constant 6 : index
    %c0_80 = arith.constant 0 : index
    %128 = vector.load %arg2[%c1_78, %c6_79, %c0_80] : memref<2x8x256xf32, #tpu.memory_space<vmem>>, vector<1x1x256xf32>
    %129 = vector.shape_cast %128 : vector<1x1x256xf32> to vector<1x256xf32>
    %130 = vector.broadcast %127 : vector<1x256xf32> to vector<4x256xf32>
    %131 = arith.mulf %123, %130 : vector<4x256xf32>
    %132 = vector.broadcast %129 : vector<1x256xf32> to vector<4x256xf32>
    %133 = arith.mulf %125, %132 : vector<4x256xf32>
    %134 = arith.subf %131, %133 : vector<4x256xf32>
    %135 = vector.broadcast %129 : vector<1x256xf32> to vector<4x256xf32>
    %136 = arith.mulf %123, %135 : vector<4x256xf32>
    %137 = vector.broadcast %127 : vector<1x256xf32> to vector<4x256xf32>
    %138 = arith.mulf %125, %137 : vector<4x256xf32>
    %139 = arith.addf %136, %138 : vector<4x256xf32>
    %140 = arith.addf %120, %134 : vector<4x256xf32>
    %141 = arith.addf %121, %139 : vector<4x256xf32>
    %c0_81 = arith.constant 0 : index
    %c12_82 = arith.constant 12 : index
    %c0_83 = arith.constant 0 : index
    %142 = vector.load %arg1[%c0_81, %c12_82, %c0_83] : memref<2x16x256xf32, #tpu.memory_space<vmem>>, vector<1x4x256xf32>
    %143 = vector.shape_cast %142 : vector<1x4x256xf32> to vector<4x256xf32>
    %c1_84 = arith.constant 1 : index
    %c12_85 = arith.constant 12 : index
    %c0_86 = arith.constant 0 : index
    %144 = vector.load %arg1[%c1_84, %c12_85, %c0_86] : memref<2x16x256xf32, #tpu.memory_space<vmem>>, vector<1x4x256xf32>
    %145 = vector.shape_cast %144 : vector<1x4x256xf32> to vector<4x256xf32>
    %c0_87 = arith.constant 0 : index
    %c7 = arith.constant 7 : index
    %c0_88 = arith.constant 0 : index
    %146 = vector.load %arg2[%c0_87, %c7, %c0_88] : memref<2x8x256xf32, #tpu.memory_space<vmem>>, vector<1x1x256xf32>
    %147 = vector.shape_cast %146 : vector<1x1x256xf32> to vector<1x256xf32>
    %c1_89 = arith.constant 1 : index
    %c7_90 = arith.constant 7 : index
    %c0_91 = arith.constant 0 : index
    %148 = vector.load %arg2[%c1_89, %c7_90, %c0_91] : memref<2x8x256xf32, #tpu.memory_space<vmem>>, vector<1x1x256xf32>
    %149 = vector.shape_cast %148 : vector<1x1x256xf32> to vector<1x256xf32>
    %150 = vector.broadcast %147 : vector<1x256xf32> to vector<4x256xf32>
    %151 = arith.mulf %143, %150 : vector<4x256xf32>
    %152 = vector.broadcast %149 : vector<1x256xf32> to vector<4x256xf32>
    %153 = arith.mulf %145, %152 : vector<4x256xf32>
    %154 = arith.subf %151, %153 : vector<4x256xf32>
    %155 = vector.broadcast %149 : vector<1x256xf32> to vector<4x256xf32>
    %156 = arith.mulf %143, %155 : vector<4x256xf32>
    %157 = vector.broadcast %147 : vector<1x256xf32> to vector<4x256xf32>
    %158 = arith.mulf %145, %157 : vector<4x256xf32>
    %159 = arith.addf %156, %158 : vector<4x256xf32>
    %160 = arith.addf %140, %154 : vector<4x256xf32>
    %161 = arith.addf %141, %159 : vector<4x256xf32>
    %c0_92 = arith.constant 0 : index
    %c4_93 = arith.constant 4 : index
    %c0_94 = arith.constant 0 : index
    %162 = vector.load %arg3[%c0_92, %c4_93, %c0_94] : memref<2x8x256xf32, #tpu.memory_space<vmem>>, vector<1x4x256xf32>
    %163 = vector.shape_cast %162 : vector<1x4x256xf32> to vector<4x256xf32>
    %164 = vector.shape_cast %160 : vector<4x256xf32> to vector<1x4x256xf32>
    tpu.vector_store %arg3[%c0_92, %c4_93, %c0_94], %164 {strides = array<i32>} : memref<2x8x256xf32, #tpu.memory_space<vmem>>, vector<1x4x256xf32>,
    %c1_95 = arith.constant 1 : index
    %c4_96 = arith.constant 4 : index
    %c0_97 = arith.constant 0 : index
    %165 = vector.load %arg3[%c1_95, %c4_96, %c0_97] : memref<2x8x256xf32, #tpu.memory_space<vmem>>, vector<1x4x256xf32>
    %166 = vector.shape_cast %165 : vector<1x4x256xf32> to vector<4x256xf32>
    %167 = vector.shape_cast %161 : vector<4x256xf32> to vector<1x4x256xf32>
    tpu.vector_store %arg3[%c1_95, %c4_96, %c0_97], %167 {strides = array<i32>} : memref<2x8x256xf32, #tpu.memory_space<vmem>>, vector<1x4x256xf32>,
    return
  }
  func.func @transform_0(%arg0: i32) -> (i32, i32, i32) {
    %c0_i32 = arith.constant 0 : i32
    %c0_i32_0 = arith.constant 0 : i32
    %c0_i32_1 = arith.constant 0 : i32
    return %c0_i32, %c0_i32_0, %arg0 : i32, i32, i32
  }
  func.func @transform_1(%arg0: i32) -> (i32, i32, i32) {
    %c0_i32 = arith.constant 0 : i32
    %c0_i32_0 = arith.constant 0 : i32
    %c0_i32_1 = arith.constant 0 : i32
    return %c0_i32, %c0_i32_0, %arg0 : i32, i32, i32
  }
  func.func @transform_2(%arg0: i32) -> (i32, i32, i32) {
    %c0_i32 = arith.constant 0 : i32
    %c0_i32_0 = arith.constant 0 : i32
    %c0_i32_1 = arith.constant 0 : i32
    return %c0_i32, %c0_i32_0, %arg0 : i32, i32, i32
  }
}

</mosaic_0001>

<llo_original>
// kernel: tpu_custom_call.1
$region0: #{tpu_custom_call.1}
  #allocation0 [shape = 'u32[]', space=smem, size = 0x4, offset = 0x4, fixed_abs, tag = 'smem constant byte address 0x4 - core index']
  #allocation1 [shape = 'u32[144,128]{1,0:T(1,128)}', space=vmem, size = 0x12000, scoped, tag = 'internal scratch']
  %s0 = inlined_call_operand.hbm [shape: f32[2,16,256], index: 0, kind: input, shape index: {}]
  %s1 = inlined_call_operand.hbm [shape: f32[2,8,256], index: 1, kind: input, shape index: {}]
  %s2 = inlined_call_operand.hbm [shape: f32[2,8,256], index: 2, kind: output, shape index: {}]
  %s3 = sld [smem:[#allocation0]]
  $region26: #{tpu_custom_call.1} parent=0
    _
  %s5 = ssub.s32 1, %s3
  %s6 = scalar_select 0, %s5, %s3
  $region1: #{tpu_custom_call.1} parent=0
    #allocation2 [shape = 'u8[32768]{0}', space=vmem, size = 0x8000, scoped, tag = 'input window, operand 0, single buffered']
    #allocation3 [shape = 's32[1]{0}', space=sflag, size = 0x4, scoped, tag = 'scoped memory for tpu_custom_call.1']
    #allocation4 [shape = 's32[1]{0}', space=sflag, size = 0x4, scoped, tag = 'scoped memory for tpu_custom_call.1']
    #allocation5 [shape = 'u8[16384]{0}', space=vmem, size = 0x4000, scoped, tag = 'input window, operand 1, single buffered']
    #allocation6 [shape = 's32[1]{0}', space=sflag, size = 0x4, scoped, tag = 'scoped memory for tpu_custom_call.1']
    #allocation7 [shape = 'u8[16384]{0}', space=vmem, size = 0x4000, scoped, tag = 'output window, operand 0, single buffered']
    %7 = vsyncpa [#allocation3], 0
    %8 = vsyncpa [#allocation6], 0
    %9 = vsyncpa [#allocation4], 0
    // Predicated region
    $region2: #{tpu_custom_call.1} parent=1 // pred_check
      _
    $region3: #{tpu_custom_call.1} parent=1 // pred_check_branch
      %11 = sbr.rel (0) target = $region5
    $region4: #{tpu_custom_call.1} parent=1 // pred_region
      %s13 = ssub.s32 1024, 1024
      %14 = vsyncadd [#allocation3], %s13
      %s15 = sshll.u32 [#allocation2], 4
      %s16 = int_to_ptr.vmem [resolvable:$true] %s15
      %21 = dma.hbm_to_vmem [thread:$0]  %s0, 1024, %s16, [#allocation3], 256, 256, 16
    $region5: #{tpu_custom_call.1} parent=1 // pred_fallthru
      _
    // Predicated region
    $region6: #{tpu_custom_call.1} parent=1 // pred_check
      _
    $region7: #{tpu_custom_call.1} parent=1 // pred_check_branch
      %23 = sbr.rel (0) target = $region9
    $region8: #{tpu_custom_call.1} parent=1 // pred_region
      %s25 = ssub.s32 512, 512
      %26 = vsyncadd [#allocation6], %s25
      %s27 = sshll.u32 [#allocation5], 4
      %s28 = int_to_ptr.vmem [resolvable:$true] %s27
      %33 = dma.hbm_to_vmem [thread:$0]  %s1, 512, %s28, [#allocation6], 256, 256, 16
    $region9: #{tpu_custom_call.1} parent=1 // pred_fallthru
      _
    // Predicated region
    $region10: #{tpu_custom_call.1} parent=1 // pred_check
      _
    $region11: #{tpu_custom_call.1} parent=1 // pred_check_branch
      %35 = sbr.rel (0) target = $region13
    $region12: #{tpu_custom_call.1} parent=1 // pred_region
      %36 = dma.done [#allocation3], 1024
    $region13: #{tpu_custom_call.1} parent=1 // pred_fallthru
      _
    // Predicated region
    $region14: #{tpu_custom_call.1} parent=1 // pred_check
      _
    $region15: #{tpu_custom_call.1} parent=1 // pred_check_branch
      %38 = sbr.rel (0) target = $region17
    $region16: #{tpu_custom_call.1} parent=1 // pred_region
      %39 = dma.done [#allocation6], 512
    $region17: #{tpu_custom_call.1} parent=1 // pred_fallthru
      _
    %v40 = vld [vmem:[#allocation2] sm:$0xf]
    %v41 = vld [vmem:[#allocation2 + $0x8] sm:$0xf]
    %s42 = scalar_lea.vmem [#allocation2], 32
    %v43 = vld [vmem:[%s42] sm:$0xf]
    %v44 = vld [vmem:[%s42 + $0x8] sm:$0xf]
    %v45 = vld [vmem:[#allocation5] ss:$8 sm:$0x3]
    %s46 = scalar_lea.vmem [#allocation5], 16
    %v47 = vld [vmem:[%s46] ss:$8 sm:$0x3]
    %v49 = vlaneseq
    %v50 = vshrl.u32 %v49, 7
    %v51 = vsub.s32 0, %v50
    %v52 = vrot.slane %v45, %v51
    %v53 = vlaneseq
    %v54 = vshrl.u32 %v53, 7
    %v55 = vsub.s32 1, %v54
    %v56 = vrot.slane %v45, %v55
    %v59 = vmul.f32 %v40, %v52
    %v60 = vmul.f32 %v41, %v56
    %v62 = vlaneseq
    %v63 = vshrl.u32 %v62, 7
    %v64 = vsub.s32 0, %v63
    %v65 = vrot.slane %v47, %v64
    %v66 = vlaneseq
    %v67 = vshrl.u32 %v66, 7
    %v68 = vsub.s32 1, %v67
    %v69 = vrot.slane %v47, %v68
    %v72 = vmul.f32 %v43, %v65
    %v73 = vmul.f32 %v44, %v69
    %v74 = vsub.f32 %v59, %v72
    %v75 = vsub.f32 %v60, %v73
    %v76 = vmul.f32 %v40, %v65
    %v77 = vmul.f32 %v41, %v69
    %v78 = vmul.f32 %v43, %v52
    %v79 = vmul.f32 %v44, %v56
    %v80 = vadd.f32 %v76, %v78
    %v81 = vadd.f32 %v77, %v79
    %v82 = vld [vmem:[#allocation2] sm:$0xf0]
    %v83 = vld [vmem:[#allocation2 + $0x8] sm:$0xf0]
    %v84 = vld [vmem:[%s42] sm:$0xf0]
    %v85 = vld [vmem:[%s42 + $0x8] sm:$0xf0]
    %s86 = scalar_lea.vmem [#allocation5], 1
    %v87 = vld [vmem:[%s86] ss:$8 sm:$0x3]
    %s88 = scalar_lea.vmem %s46, 1 [#allocation5]
    %v89 = vld [vmem:[%s88] ss:$8 sm:$0x3]
    %v91 = vlaneseq
    %v92 = vshrl.u32 %v91, 7
    %v93 = vsub.s32 0, %v92
    %v94 = vrot.slane %v87, %v93
    %v95 = vlaneseq
    %v96 = vshrl.u32 %v95, 7
    %v97 = vsub.s32 1, %v96
    %v98 = vrot.slane %v87, %v97
    %v101 = vmul.f32 %v82, %v94
    %v102 = vmul.f32 %v83, %v98
    %v104 = vlaneseq
    %v105 = vshrl.u32 %v104, 7
    %v106 = vsub.s32 0, %v105
    %v107 = vrot.slane %v89, %v106
    %v108 = vlaneseq
    %v109 = vshrl.u32 %v108, 7
    %v110 = vsub.s32 1, %v109
    %v111 = vrot.slane %v89, %v110
    %v114 = vmul.f32 %v84, %v107
    %v115 = vmul.f32 %v85, %v111
    %v116 = vsub.f32 %v101, %v114
    %v117 = vsub.f32 %v102, %v115
    %v118 = vmul.f32 %v82, %v107
    %v119 = vmul.f32 %v83, %v111
    %v120 = vmul.f32 %v84, %v94
    %v121 = vmul.f32 %v85, %v98
    %v122 = vadd.f32 %v118, %v120
    %v123 = vadd.f32 %v119, %v121
    %v126 = vrot.slane %v116, 4
    %v127 = vrot.slane %v117, 4
    %v130 = vadd.f32 %v74, %v126
    %v131 = vadd.f32 %v75, %v127
    %v134 = vrot.slane %v122, 4
    %v135 = vrot.slane %v123, 4
    %v138 = vadd.f32 %v80, %v134
    %v139 = vadd.f32 %v81, %v135
    %v140 = vld [vmem:[#allocation2 + $0x10] sm:$0xf]
    %v141 = vld [vmem:[#allocation2 + $0x18] sm:$0xf]
    %v142 = vld [vmem:[%s42 + $0x10] sm:$0xf]
    %v143 = vld [vmem:[%s42 + $0x18] sm:$0xf]
    %s144 = scalar_lea.vmem [#allocation5], 2
    %v145 = vld [vmem:[%s144] ss:$8 sm:$0x3]
    %s146 = scalar_lea.vmem %s46, 2 [#allocation5]
    %v147 = vld [vmem:[%s146] ss:$8 sm:$0x3]
    %v149 = vlaneseq
    %v150 = vshrl.u32 %v149, 7
    %v151 = vsub.s32 0, %v150
    %v152 = vrot.slane %v145, %v151
    %v153 = vlaneseq
    %v154 = vshrl.u32 %v153, 7
    %v155 = vsub.s32 1, %v154
    %v156 = vrot.slane %v145, %v155
    %v159 = vmul.f32 %v140, %v152
    %v160 = vmul.f32 %v141, %v156
    %v162 = vlaneseq
    %v163 = vshrl.u32 %v162, 7
    %v164 = vsub.s32 0, %v163
    %v165 = vrot.slane %v147, %v164
    %v166 = vlaneseq
    %v167 = vshrl.u32 %v166, 7
    %v168 = vsub.s32 1, %v167
    %v169 = vrot.slane %v147, %v168
    %v172 = vmul.f32 %v142, %v165
    %v173 = vmul.f32 %v143, %v169
    %v174 = vsub.f32 %v159, %v172
    %v175 = vsub.f32 %v160, %v173
    %v176 = vmul.f32 %v140, %v165
    %v177 = vmul.f32 %v141, %v169
    %v178 = vmul.f32 %v142, %v152
    %v179 = vmul.f32 %v143, %v156
    %v180 = vadd.f32 %v176, %v178
    %v181 = vadd.f32 %v177, %v179
    %v182 = vadd.f32 %v130, %v174
    %v183 = vadd.f32 %v131, %v175
    %v184 = vadd.f32 %v138, %v180
    %v185 = vadd.f32 %v139, %v181
    %v186 = vld [vmem:[#allocation2 + $0x10] sm:$0xf0]
    %v187 = vld [vmem:[#allocation2 + $0x18] sm:$0xf0]
    %v188 = vld [vmem:[%s42 + $0x10] sm:$0xf0]
    %v189 = vld [vmem:[%s42 + $0x18] sm:$0xf0]
    %s190 = scalar_lea.vmem [#allocation5], 3
    %v191 = vld [vmem:[%s190] ss:$8 sm:$0x3]
    %s192 = scalar_lea.vmem %s46, 3 [#allocation5]
    %v193 = vld [vmem:[%s192] ss:$8 sm:$0x3]
    %v195 = vlaneseq
    %v196 = vshrl.u32 %v195, 7
    %v197 = vsub.s32 0, %v196
    %v198 = vrot.slane %v191, %v197
    %v199 = vlaneseq
    %v200 = vshrl.u32 %v199, 7
    %v201 = vsub.s32 1, %v200
    %v202 = vrot.slane %v191, %v201
    %v205 = vmul.f32 %v186, %v198
    %v206 = vmul.f32 %v187, %v202
    %v208 = vlaneseq
    %v209 = vshrl.u32 %v208, 7
    %v210 = vsub.s32 0, %v209
    %v211 = vrot.slane %v193, %v210
    %v212 = vlaneseq
    %v213 = vshrl.u32 %v212, 7
    %v214 = vsub.s32 1, %v213
    %v215 = vrot.slane %v193, %v214
    %v218 = vmul.f32 %v188, %v211
    %v219 = vmul.f32 %v189, %v215
    %v220 = vsub.f32 %v205, %v218
    %v221 = vsub.f32 %v206, %v219
    %v222 = vmul.f32 %v186, %v211
    %v223 = vmul.f32 %v187, %v215
    %v224 = vmul.f32 %v188, %v198
    %v225 = vmul.f32 %v189, %v202
    %v226 = vadd.f32 %v222, %v224
    %v227 = vadd.f32 %v223, %v225
    %v230 = vrot.slane %v220, 4
    %v231 = vrot.slane %v221, 4
    %v234 = vadd.f32 %v182, %v230
    %v235 = vadd.f32 %v183, %v231
    %v238 = vrot.slane %v226, 4
    %v239 = vrot.slane %v227, 4
    %v242 = vadd.f32 %v184, %v238
    %v243 = vadd.f32 %v185, %v239
    %244 = vst [vmem:[#allocation7] sm:$0xf] %v234
    %245 = vst [vmem:[#allocation7 + $0x8] sm:$0xf] %v235
    %s246 = scalar_lea.vmem [#allocation7], 16
    %247 = vst [vmem:[%s246] sm:$0xf] %v242
    %248 = vst [vmem:[%s246 + $0x8] sm:$0xf] %v243
    %v249 = vld [vmem:[#allocation2] sm:$0xf]
    %v250 = vld [vmem:[#allocation2 + $0x8] sm:$0xf]
    %v251 = vld [vmem:[%s42] sm:$0xf]
    %v252 = vld [vmem:[%s42 + $0x8] sm:$0xf]
    %s253 = scalar_lea.vmem [#allocation5], 4
    %v254 = vld [vmem:[%s253] ss:$8 sm:$0x3]
    %s255 = scalar_lea.vmem %s46, 4 [#allocation5]
    %v256 = vld [vmem:[%s255] ss:$8 sm:$0x3]
    %v258 = vlaneseq
    %v259 = vshrl.u32 %v258, 7
    %v260 = vsub.s32 0, %v259
    %v261 = vrot.slane %v254, %v260
    %v262 = vlaneseq
    %v263 = vshrl.u32 %v262, 7
    %v264 = vsub.s32 1, %v263
    %v265 = vrot.slane %v254, %v264
    %v268 = vmul.f32 %v249, %v261
    %v269 = vmul.f32 %v250, %v265
    %v271 = vlaneseq
    %v272 = vshrl.u32 %v271, 7
    %v273 = vsub.s32 0, %v272
    %v274 = vrot.slane %v256, %v273
    %v275 = vlaneseq
    %v276 = vshrl.u32 %v275, 7
    %v277 = vsub.s32 1, %v276
    %v278 = vrot.slane %v256, %v277
    %v281 = vmul.f32 %v251, %v274
    %v282 = vmul.f32 %v252, %v278
    %v283 = vsub.f32 %v268, %v281
    %v284 = vsub.f32 %v269, %v282
    %v285 = vmul.f32 %v249, %v274
    %v286 = vmul.f32 %v250, %v278
    %v287 = vmul.f32 %v251, %v261
    %v288 = vmul.f32 %v252, %v265
    %v289 = vadd.f32 %v285, %v287
    %v290 = vadd.f32 %v286, %v288
    %v291 = vld [vmem:[#allocation2] sm:$0xf0]
    %v292 = vld [vmem:[#allocation2 + $0x8] sm:$0xf0]
    %v293 = vld [vmem:[%s42] sm:$0xf0]
    %v294 = vld [vmem:[%s42 + $0x8] sm:$0xf0]
    %s295 = scalar_lea.vmem [#allocation5], 5
    %v296 = vld [vmem:[%s295] ss:$8 sm:$0x3]
    %s297 = scalar_lea.vmem %s46, 5 [#allocation5]
    %v298 = vld [vmem:[%s297] ss:$8 sm:$0x3]
    %v300 = vlaneseq
    %v301 = vshrl.u32 %v300, 7
    %v302 = vsub.s32 0, %v301
    %v303 = vrot.slane %v296, %v302
    %v304 = vlaneseq
    %v305 = vshrl.u32 %v304, 7
    %v306 = vsub.s32 1, %v305
    %v307 = vrot.slane %v296, %v306
    %v310 = vmul.f32 %v291, %v303
    %v311 = vmul.f32 %v292, %v307
    %v313 = vlaneseq
    %v314 = vshrl.u32 %v313, 7
    %v315 = vsub.s32 0, %v314
    %v316 = vrot.slane %v298, %v315
    %v317 = vlaneseq
    %v318 = vshrl.u32 %v317, 7
    %v319 = vsub.s32 1, %v318
    %v320 = vrot.slane %v298, %v319
    %v323 = vmul.f32 %v293, %v316
    %v324 = vmul.f32 %v294, %v320
    %v325 = vsub.f32 %v310, %v323
    %v326 = vsub.f32 %v311, %v324
    %v327 = vmul.f32 %v291, %v316
    %v328 = vmul.f32 %v292, %v320
    %v329 = vmul.f32 %v293, %v303
    %v330 = vmul.f32 %v294, %v307
    %v331 = vadd.f32 %v327, %v329
    %v332 = vadd.f32 %v328, %v330
    %v335 = vrot.slane %v325, 4
    %v336 = vrot.slane %v326, 4
    %v339 = vadd.f32 %v283, %v335
    %v340 = vadd.f32 %v284, %v336
    %v343 = vrot.slane %v331, 4
    %v344 = vrot.slane %v332, 4
    %v347 = vadd.f32 %v289, %v343
    %v348 = vadd.f32 %v290, %v344
    %v349 = vld [vmem:[#allocation2 + $0x10] sm:$0xf]
    %v350 = vld [vmem:[#allocation2 + $0x18] sm:$0xf]
    %v351 = vld [vmem:[%s42 + $0x10] sm:$0xf]
    %v352 = vld [vmem:[%s42 + $0x18] sm:$0xf]
    %s353 = scalar_lea.vmem [#allocation5], 6
    %v354 = vld [vmem:[%s353] ss:$8 sm:$0x3]
    %s355 = scalar_lea.vmem %s46, 6 [#allocation5]
    %v356 = vld [vmem:[%s355] ss:$8 sm:$0x3]
    %v358 = vlaneseq
    %v359 = vshrl.u32 %v358, 7
    %v360 = vsub.s32 0, %v359
    %v361 = vrot.slane %v354, %v360
    %v362 = vlaneseq
    %v363 = vshrl.u32 %v362, 7
    %v364 = vsub.s32 1, %v363
    %v365 = vrot.slane %v354, %v364
    %v368 = vmul.f32 %v349, %v361
    %v369 = vmul.f32 %v350, %v365
    %v371 = vlaneseq
    %v372 = vshrl.u32 %v371, 7
    %v373 = vsub.s32 0, %v372
    %v374 = vrot.slane %v356, %v373
    %v375 = vlaneseq
    %v376 = vshrl.u32 %v375, 7
    %v377 = vsub.s32 1, %v376
    %v378 = vrot.slane %v356, %v377
    %v381 = vmul.f32 %v351, %v374
    %v382 = vmul.f32 %v352, %v378
    %v383 = vsub.f32 %v368, %v381
    %v384 = vsub.f32 %v369, %v382
    %v385 = vmul.f32 %v349, %v374
    %v386 = vmul.f32 %v350, %v378
    %v387 = vmul.f32 %v351, %v361
    %v388 = vmul.f32 %v352, %v365
    %v389 = vadd.f32 %v385, %v387
    %v390 = vadd.f32 %v386, %v388
    %v391 = vadd.f32 %v339, %v383
    %v392 = vadd.f32 %v340, %v384
    %v393 = vadd.f32 %v347, %v389
    %v394 = vadd.f32 %v348, %v390
    %v395 = vld [vmem:[#allocation2 + $0x10] sm:$0xf0]
    %v396 = vld [vmem:[#allocation2 + $0x18] sm:$0xf0]
    %v397 = vld [vmem:[%s42 + $0x10] sm:$0xf0]
    %v398 = vld [vmem:[%s42 + $0x18] sm:$0xf0]
    %s399 = scalar_lea.vmem [#allocation5], 7
    %v400 = vld [vmem:[%s399] ss:$8 sm:$0x3]
    %s401 = scalar_lea.vmem %s46, 7 [#allocation5]
    %v402 = vld [vmem:[%s401] ss:$8 sm:$0x3]
    %v404 = vlaneseq
    %v405 = vshrl.u32 %v404, 7
    %v406 = vsub.s32 0, %v405
    %v407 = vrot.slane %v400, %v406
    %v408 = vlaneseq
    %v409 = vshrl.u32 %v408, 7
    %v410 = vsub.s32 1, %v409
    %v411 = vrot.slane %v400, %v410
    %v414 = vmul.f32 %v395, %v407
    %v415 = vmul.f32 %v396, %v411
    %v417 = vlaneseq
    %v418 = vshrl.u32 %v417, 7
    %v419 = vsub.s32 0, %v418
    %v420 = vrot.slane %v402, %v419
    %v421 = vlaneseq
    %v422 = vshrl.u32 %v421, 7
    %v423 = vsub.s32 1, %v422
    %v424 = vrot.slane %v402, %v423
    %v427 = vmul.f32 %v397, %v420
    %v428 = vmul.f32 %v398, %v424
    %v429 = vsub.f32 %v414, %v427
    %v430 = vsub.f32 %v415, %v428
    %v431 = vmul.f32 %v395, %v420
    %v432 = vmul.f32 %v396, %v424
    %v433 = vmul.f32 %v397, %v407
    %v434 = vmul.f32 %v398, %v411
    %v435 = vadd.f32 %v431, %v433
    %v436 = vadd.f32 %v432, %v434
    %v439 = vrot.slane %v429, 4
    %v440 = vrot.slane %v430, 4
    %v443 = vadd.f32 %v391, %v439
    %v444 = vadd.f32 %v392, %v440
    %v447 = vrot.slane %v435, 4
    %v448 = vrot.slane %v436, 4
    %v451 = vadd.f32 %v393, %v447
    %v452 = vadd.f32 %v394, %v448
    %v455 = vrot.slane %v443, 4
    %v456 = vrot.slane %v444, 4
    %459 = vst [vmem:[#allocation7] sm:$0xf0] %v455
    %460 = vst [vmem:[#allocation7 + $0x8] sm:$0xf0] %v456
    %v463 = vrot.slane %v451, 4
    %v464 = vrot.slane %v452, 4
    %467 = vst [vmem:[%s246] sm:$0xf0] %v463
    %468 = vst [vmem:[%s246 + $0x8] sm:$0xf0] %v464
    // Predicated region
    $region18: #{tpu_custom_call.1} parent=1 // pred_check
      _
    $region19: #{tpu_custom_call.1} parent=1 // pred_check_branch
      %470 = sbr.rel (0) target = $region21
    $region20: #{tpu_custom_call.1} parent=1 // pred_region
      %s472 = ssub.s32 512, 512
      %473 = vsyncadd [#allocation4], %s472
      %s474 = sshll.u32 [#allocation7], 4
      %s475 = int_to_ptr.vmem [resolvable:$true] %s474
      %480 = dma.vmem_to_hbm [thread:$0]  %s475, 512, %s2, [#allocation4], 256, 256, 16
    $region21: #{tpu_custom_call.1} parent=1 // pred_fallthru
      _
    // Predicated region
    $region22: #{tpu_custom_call.1} parent=1 // pred_check
      _
    $region23: #{tpu_custom_call.1} parent=1 // pred_check_branch
      %482 = sbr.rel (0) target = $region25
    $region24: #{tpu_custom_call.1} parent=1 // pred_region
      %483 = dma.done [#allocation4], 512
    $region25: #{tpu_custom_call.1} parent=1 // pred_fallthru
      _
    %484 = vsyncpa [#allocation3], 1
    %485 = vsyncpa [#allocation6], 1
    %486 = vsyncpa [#allocation4], 1

</llo_original>
